<compile_context>
chip_gen: v6e
topology: v6e:2x2x1
jax: 0.10.0
libtpu: 0.0.40
codegen_flags: <defaults>
</compile_context>

<pallas_src>
import jax
import jax.numpy as jnp
from jax.experimental import pallas as pl
from jax.experimental.pallas import tpu as pltpu


def _round_up(x, m):
    return (x + m - 1) // m * m


def _choose_row_tile(N, row_tile):
    """Pick TM (multiple of 8): prefer a divisor of N near the target so the
    activation pad pass is skipped, and prefer >=2 grid steps (v7x megacore)."""
    N = max(N, 1)
    if N <= 8:
        return 8
    target = min(row_tile, max(8, _round_up((N + 1) // 2, 8)))
    target = max(target - target % 8, 8)
    tm = target
    # Accept a divisor only if it is at least half the target (don't explode
    # the number of grid steps just to avoid a small pad).
    while tm >= 8 and tm * 2 >= target:
        if N % tm == 0:
            return tm
        tm -= 8
    return target


def _qmodel_kernel(s_ref, d_ref, w1s_ref, w1d_ref, b1_ref, w2_ref, b2_ref, o_ref):
    """out = relu(state @ w1s + demo @ w1d + b1) @ w2 + b2 for one row tile.

    state/demo tiles arrive as f32 and are cast to bf16 here (VPU, hidden under
    DMA); weights are already bf16; accumulation / bias / ReLU stay in f32.
    """
    cd = w1s_ref.dtype  # bf16
    s = s_ref[...].astype(cd)
    d = d_ref[...].astype(cd)
    # "concat" fused as two partial matmuls accumulating into the same f32 tile.
    h = jnp.dot(s, w1s_ref[...], preferred_element_type=jnp.float32)
    h = h + jnp.dot(d, w1d_ref[...], preferred_element_type=jnp.float32)
    h = jnp.maximum(h + b1_ref[...], 0.0)              # f32 epilogue (v5e-safe)
    o = jnp.dot(h.astype(cd), w2_ref[...], preferred_element_type=jnp.float32)
    a = o_ref.shape[1]                                  # true action_dim
    # Narrow (un-padded) store: only A lanes go back to HBM.
    o_ref[...] = (o[:, :a] + b2_ref[...]).astype(o_ref.dtype)


def demonstration_q_forward(state, demonstration, params, *, row_tile=2048):
    """state: (T, B, F) f32; demonstration: (T, B, L, F) f32.

    Returns q-values of shape (T, B, action_dim), matching
    restore_leading_dims(output, lead_dim=2, T, B) in the PyTorch module.
    """
    w1, b1, w2, b2 = params["w1"], params["b1"], params["w2"], params["b2"]
    T, B, F = state.shape
    L = demonstration.shape[2]
    LF = L * F
    N = T * B
    H = w1.shape[1]
    A = w2.shape[1]

    compute_dtype = jnp.bfloat16

    # ---- lane-dense zero padding of hidden / output matmul dims (exact) ----
    H_pad = _round_up(H, 128)
    A_pad = _round_up(A, 128)

    w1s = jnp.zeros((F, H_pad), compute_dtype).at[:, :H].set(
        w1[:F, :].astype(compute_dtype))
    w1d = jnp.zeros((LF, H_pad), compute_dtype).at[:, :H].set(
        w1[F:, :].astype(compute_dtype))
    b1p = jnp.zeros((1, H_pad), jnp.float32).at[:, :H].set(
        b1.reshape(1, H).astype(jnp.float32))
    w2p = jnp.zeros((H_pad, A_pad), compute_dtype).at[:H, :A].set(
        w2.astype(compute_dtype))
    b2p = b2.reshape(1, A).astype(jnp.float32)          # un-padded bias

    # ---- VMEM budget (f32 row tiles, double-buffered) and row-tile choice ----
    per_row = (2 * (F + LF + A) * 4        # double-buffered f32 in/out row tiles
               + (F + LF) * 2              # in-kernel bf16 copies of the row tile
               + H_pad * 4 + A_pad * 4)    # f32 hidden / pre-slice output
    weight_bytes = ((F + LF) * H_pad + H_pad * A_pad) * 2 + H_pad * 4 + A * 4
    budget = 40 << 20                      # headroom under v7x's 64 MiB VMEM
    max_tm = max(8, (((budget // 2) - weight_bytes) // per_row) // 8 * 8)

    TM = _choose_row_tile(N, min(row_tile, max_tm))
    N_pad = _round_up(N, TM)
    grid = (N_pad // TM,)

    needed = TM * per_row + weight_bytes
    vmem_limit = int(min(max(2 * needed, 8 << 20), 48 << 20))

    # ---- activations: no wrapper cast; pad rows only when TM doesn't divide N.
    # Padded rows are zeros -> computed then sliced away (harmless, exact). ----
    s2 = state.reshape(N, F)
    d2 = demonstration.reshape(N, LF)
    if N_pad != N:
        s2 = jnp.pad(s2, ((0, N_pad - N), (0, 0)))
        d2 = jnp.pad(d2, ((0, N_pad - N), (0, 0)))

    out = pl.pallas_call(
        _qmodel_kernel,
        out_shape=jax.ShapeDtypeStruct((N_pad, A), jnp.float32),
        grid=grid,
        in_specs=[
            pl.BlockSpec((TM, F), lambda i: (i, 0)),         # state rows (f32)
            pl.BlockSpec((TM, LF), lambda i: (i, 0)),        # demonstration rows (f32)
            pl.BlockSpec((F, H_pad), lambda i: (0, 0)),      # w1 (state part), resident
            pl.BlockSpec((LF, H_pad), lambda i: (0, 0)),     # w1 (demo part), resident
            pl.BlockSpec((1, H_pad), lambda i: (0, 0)),      # b1 (f32)
            pl.BlockSpec((H_pad, A_pad), lambda i: (0, 0)),  # w2, resident
            pl.BlockSpec((1, A), lambda i: (0, 0)),          # b2 (f32, un-padded)
        ],
        out_specs=pl.BlockSpec((TM, A), lambda i: (i, 0)),   # narrow output store
        compiler_params=pltpu.CompilerParams(
            dimension_semantics=("parallel",),
            vmem_limit_bytes=vmem_limit,
        ),
    )(s2, d2, w1s, w1d, b1p, w2p, b2p)

    if N_pad != N:
        out = out[:N]
    return out.reshape(T, B, A)


def init_params(key, input_size, demo_len, action_dim):
    """Deterministic PyTorch-Linear-style init (uniform +/- 1/sqrt(fan_in)).

    Weights stored transposed: (in_features, out_features).
    """
    d_in = input_size + demo_len * input_size
    hidden = 4 * input_size
    k1, k2, k3, k4 = jax.random.split(key, 4)
    bound1 = 1.0 / jnp.sqrt(d_in)
    bound2 = 1.0 / jnp.sqrt(hidden)
    return {
        "w1": jax.random.uniform(k1, (d_in, hidden), jnp.float32, -bound1, bound1),
        "b1": jax.random.uniform(k2, (1, hidden), jnp.float32, -bound1, bound1),
        "w2": jax.random.uniform(k3, (hidden, action_dim), jnp.float32, -bound2, bound2),
        "b2": jax.random.uniform(k4, (1, action_dim), jnp.float32, -bound2, bound2),
    }


def _reference(state, demonstration, params):
    """Pure-JAX f32 reference (mirrors the PyTorch forward)."""
    T, B, F = state.shape
    L = demonstration.shape[2]
    x = jnp.concatenate(
        [state.reshape(T * B, F), demonstration.reshape(T * B, L * F)], axis=-1
    )
    h = jnp.maximum(x @ params["w1"] + params["b1"], 0.0)
    o = h @ params["w2"] + params["b2"]
    return o.reshape(T, B, -1)


if __name__ == "__main__":
    # Small shapes consistent with the module:
    #   input_size = 16 (observation.state features)
    #   demonstration_length = 8
    #   action_dim = 6
    #   leading dims: T=2, B=4
    T, B = 2, 4
    input_size = 16
    demo_len = 8
    action_dim = 6

    key = jax.random.PRNGKey(0)
    k_state, k_demo, k_params = jax.random.split(key, 3)

    state = jax.random.normal(k_state, (T, B, input_size), jnp.float32)
    demonstration = jax.random.normal(
        k_demo, (T, B, demo_len, input_size), jnp.float32
    )
    prev_action = jnp.zeros((T, B), jnp.int32)    # unused by forward
    prev_reward = jnp.zeros((T, B), jnp.float32)  # unused by forward

    params = init_params(k_params, input_size, demo_len, action_dim)

    out = demonstration_q_forward(state, demonstration, params)
    out = jax.block_until_ready(out)

    ref = _reference(state, demonstration, params)
    assert out.shape == (T, B, action_dim), out.shape
    # bf16 matmul inputs (f32 accumulation) -> loosened tolerance vs f32 reference.
    assert jnp.allclose(out, ref, atol=3e-2, rtol=3e-2), "mismatch vs reference"

    print("KERNEL_OK")
</pallas_src>

<mosaic_0001>
module attributes {stable_mosaic.version = 11 : i64} {
  func.func @_qmodel_kernel(%arg0: i32, %arg1: memref<8x16xf32, #tpu.memory_space<vmem>>, %arg2: memref<8x128xf32, #tpu.memory_space<vmem>>, %arg3: memref<16x128xbf16, #tpu.memory_space<vmem>>, %arg4: memref<128x128xbf16, #tpu.memory_space<vmem>>, %arg5: memref<1x128xf32, #tpu.memory_space<vmem>>, %arg6: memref<128x128xbf16, #tpu.memory_space<vmem>>, %arg7: memref<1x6xf32, #tpu.memory_space<vmem>>, %arg8: memref<8x6xf32, #tpu.memory_space<vmem>>) attributes {dimension_semantics = [#tpu.dimension_semantics<parallel>], iteration_bounds = array<i64: 1>, scalar_prefetch = 0 : i64, scratch_operands = 0 : i64, tpu.core_type = #tpu.core_type<tc>, window_params = [{transform_indices = @transform_0, window_bounds = array<i64: 8, 16>}, {transform_indices = @transform_1, window_bounds = array<i64: 8, 128>}, {pipeline_mode = #tpu.pipeline_mode<synchronous>, transform_indices = @transform_2, window_bounds = array<i64: 16, 128>}, {pipeline_mode = #tpu.pipeline_mode<synchronous>, transform_indices = @transform_3, window_bounds = array<i64: 128, 128>}, {pipeline_mode = #tpu.pipeline_mode<synchronous>, transform_indices = @transform_4, window_bounds = array<i64: 1, 128>}, {pipeline_mode = #tpu.pipeline_mode<synchronous>, transform_indices = @transform_5, window_bounds = array<i64: 128, 128>}, {pipeline_mode = #tpu.pipeline_mode<synchronous>, transform_indices = @transform_6, window_bounds = array<i64: 1, 6>}, {transform_indices = @transform_7, window_bounds = array<i64: 8, 6>}]} {
    %c0 = arith.constant 0 : index
    %c0_0 = arith.constant 0 : index
    %0 = vector.load %arg1[%c0, %c0_0] : memref<8x16xf32, #tpu.memory_space<vmem>>, vector<8x16xf32>
    %1 = arith.truncf %0 : vector<8x16xf32> to vector<8x16xbf16>
    %c0_1 = arith.constant 0 : index
    %c0_2 = arith.constant 0 : index
    %2 = vector.load %arg2[%c0_1, %c0_2] : memref<8x128xf32, #tpu.memory_space<vmem>>, vector<8x128xf32>
    %3 = arith.truncf %2 : vector<8x128xf32> to vector<8x128xbf16>
    %c0_3 = arith.constant 0 : index
    %c0_4 = arith.constant 0 : index
    %4 = vector.load %arg3[%c0_3, %c0_4] : memref<16x128xbf16, #tpu.memory_space<vmem>>, vector<16x128xbf16>
    %cst = arith.constant dense<0.000000e+00> : vector<8x128xf32>
    %5 = tpu.matmul %1, %4, %cst {dimension_numbers = #tpu.dot_dimension_numbers<[1], [0], [0], [1], [0, 0, 1, 1], [], []>} : vector<8x16xbf16>, vector<16x128xbf16>, vector<8x128xf32> -> vector<8x128xf32>
    %c0_5 = arith.constant 0 : index
    %c0_6 = arith.constant 0 : index
    %6 = vector.load %arg4[%c0_5, %c0_6] : memref<128x128xbf16, #tpu.memory_space<vmem>>, vector<128x128xbf16>
    %cst_7 = arith.constant dense<0.000000e+00> : vector<8x128xf32>
    %7 = tpu.matmul %3, %6, %cst_7 {dimension_numbers = #tpu.dot_dimension_numbers<[1], [0], [0], [1], [0, 0, 1, 1], [], []>} : vector<8x128xbf16>, vector<128x128xbf16>, vector<8x128xf32> -> vector<8x128xf32>
    %8 = arith.addf %5, %7 : vector<8x128xf32>
    %c0_8 = arith.constant 0 : index
    %c0_9 = arith.constant 0 : index
    %9 = vector.load %arg5[%c0_8, %c0_9] : memref<1x128xf32, #tpu.memory_space<vmem>>, vector<1x128xf32>
    %10 = vector.broadcast %9 : vector<1x128xf32> to vector<8x128xf32>
    %11 = arith.addf %8, %10 : vector<8x128xf32>
    %cst_10 = arith.constant 0.000000e+00 : f32
    %12 = vector.broadcast %cst_10 : f32 to vector<8x128xf32>
    %13 = arith.maximumf %11, %12 : vector<8x128xf32>
    %14 = arith.truncf %13 : vector<8x128xf32> to vector<8x128xbf16>
    %c0_11 = arith.constant 0 : index
    %c0_12 = arith.constant 0 : index
    %15 = vector.load %arg6[%c0_11, %c0_12] : memref<128x128xbf16, #tpu.memory_space<vmem>>, vector<128x128xbf16>
    %cst_13 = arith.constant dense<0.000000e+00> : vector<8x128xf32>
    %16 = tpu.matmul %14, %15, %cst_13 {dimension_numbers = #tpu.dot_dimension_numbers<[1], [0], [0], [1], [0, 0, 1, 1], [], []>} : vector<8x128xbf16>, vector<128x128xbf16>, vector<8x128xf32> -> vector<8x128xf32>
    %17 = vector.extract_strided_slice %16 {offsets = [0, 0], sizes = [8, 6], strides = [1, 1]} : vector<8x128xf32> to vector<8x6xf32>
    %c0_14 = arith.constant 0 : index
    %c0_15 = arith.constant 0 : index
    %18 = vector.load %arg7[%c0_14, %c0_15] : memref<1x6xf32, #tpu.memory_space<vmem>>, vector<1x6xf32>
    %19 = vector.broadcast %18 : vector<1x6xf32> to vector<8x6xf32>
    %20 = arith.addf %17, %19 : vector<8x6xf32>
    %c0_16 = arith.constant 0 : index
    %c0_17 = arith.constant 0 : index
    %21 = vector.load %arg8[%c0_16, %c0_17] : memref<8x6xf32, #tpu.memory_space<vmem>>, vector<8x6xf32>
    tpu.vector_store %arg8[%c0_16, %c0_17], %20 {strides = array<i32>} : memref<8x6xf32, #tpu.memory_space<vmem>>, vector<8x6xf32>,
    return
  }
  func.func @transform_0(%arg0: i32) -> (i32, i32) {
    %c0_i32 = arith.constant 0 : i32
    %c0_i32_0 = arith.constant 0 : i32
    return %arg0, %c0_i32 : i32, i32
  }
  func.func @transform_1(%arg0: i32) -> (i32, i32) {
    %c0_i32 = arith.constant 0 : i32
    %c0_i32_0 = arith.constant 0 : i32
    return %arg0, %c0_i32 : i32, i32
  }
  func.func @transform_2(%arg0: i32) -> (i32, i32) {
    %c0_i32 = arith.constant 0 : i32
    %c0_i32_0 = arith.constant 0 : i32
    %c0_i32_1 = arith.constant 0 : i32
    return %c0_i32, %c0_i32_0 : i32, i32
  }
  func.func @transform_3(%arg0: i32) -> (i32, i32) {
    %c0_i32 = arith.constant 0 : i32
    %c0_i32_0 = arith.constant 0 : i32
    %c0_i32_1 = arith.constant 0 : i32
    return %c0_i32, %c0_i32_0 : i32, i32
  }
  func.func @transform_4(%arg0: i32) -> (i32, i32) {
    %c0_i32 = arith.constant 0 : i32
    %c0_i32_0 = arith.constant 0 : i32
    %c0_i32_1 = arith.constant 0 : i32
    return %c0_i32, %c0_i32_0 : i32, i32
  }
  func.func @transform_5(%arg0: i32) -> (i32, i32) {
    %c0_i32 = arith.constant 0 : i32
    %c0_i32_0 = arith.constant 0 : i32
    %c0_i32_1 = arith.constant 0 : i32
    return %c0_i32, %c0_i32_0 : i32, i32
  }
  func.func @transform_6(%arg0: i32) -> (i32, i32) {
    %c0_i32 = arith.constant 0 : i32
    %c0_i32_0 = arith.constant 0 : i32
    %c0_i32_1 = arith.constant 0 : i32
    return %c0_i32, %c0_i32_0 : i32, i32
  }
  func.func @transform_7(%arg0: i32) -> (i32, i32) {
    %c0_i32 = arith.constant 0 : i32
    %c0_i32_0 = arith.constant 0 : i32
    return %arg0, %c0_i32 : i32, i32
  }
}

</mosaic_0001>

<llo_original>
// kernel: tpu_custom_call.1
$region0: #{tpu_custom_call.1}
  #allocation0 [shape = 'u32[]', space=smem, size = 0x4, offset = 0x4, fixed_abs, tag = 'smem constant byte address 0x4 - core index']
  #allocation1 [shape = 'u32[144,128]{1,0:T(1,128)}', space=vmem, size = 0x12000, scoped, tag = 'internal scratch']
  %s0 = inlined_call_operand.hbm [shape: f32[8,16], index: 0, kind: input, shape index: {}]
  %s1 = inlined_call_operand.hbm [shape: f32[8,128], index: 1, kind: input, shape index: {}]
  %s2 = inlined_call_operand.hbm [shape: bf16[16,128], index: 2, kind: input, shape index: {}]
  %s3 = inlined_call_operand.hbm [shape: bf16[128,128], index: 3, kind: input, shape index: {}]
  %s4 = inlined_call_operand.vmem [shape: f32[1,128], index: 4, kind: input, shape index: {}]
  %s5 = inlined_call_operand.hbm [shape: bf16[128,128], index: 5, kind: input, shape index: {}]
  %s6 = inlined_call_operand.vmem [shape: f32[1,6], index: 6, kind: input, shape index: {}]
  %s7 = inlined_call_operand.hbm [shape: f32[8,6], index: 7, kind: output, shape index: {}]
  %s8 = sld [smem:[#allocation0]]
  $region58: #{tpu_custom_call.1} parent=0
    _
  %s10 = ssub.s32 1, %s8
  %s11 = scalar_select 0, %s10, %s8
  $region1: #{tpu_custom_call.1} parent=0
    #allocation2 [shape = 'u8[4096]{0}', space=vmem, size = 0x1000, scoped, tag = 'input window, operand 0, single buffered']
    #allocation3 [shape = 's32[1]{0}', space=sflag, size = 0x4, scoped, tag = 'scoped memory for tpu_custom_call.1']
    #allocation4 [shape = 's32[1]{0}', space=sflag, size = 0x4, scoped, tag = 'scoped memory for tpu_custom_call.1']
    #allocation5 [shape = 'u8[4096]{0}', space=vmem, size = 0x1000, scoped, tag = 'input window, operand 1, single buffered']
    #allocation6 [shape = 's32[1]{0}', space=sflag, size = 0x4, scoped, tag = 'scoped memory for tpu_custom_call.1']
    #allocation7 [shape = 'u8[4096]{0}', space=vmem, size = 0x1000, scoped, tag = 'input window, operand 2, single buffered']
    #allocation8 [shape = 'u8[32768]{0}', space=vmem, size = 0x8000, scoped, tag = 'input window, operand 3, single buffered']
    #allocation9 [shape = 's32[1]{0}', space=sflag, size = 0x4, scoped, tag = 'scoped memory for tpu_custom_call.1']
    #allocation10 [shape = 'u8[32768]{0}', space=vmem, size = 0x8000, scoped, tag = 'input window, operand 5, single buffered']
    #allocation11 [shape = 'u8[4096]{0}', space=vmem, size = 0x1000, scoped, tag = 'output window, operand 0, single buffered']
    %12 = vsyncpa [#allocation3], 0
    %13 = vsyncpa [#allocation6], 0
    %14 = vsyncpa [#allocation9], 0
    %15 = vsyncpa [#allocation4], 0
    // Predicated region
    $region2: #{tpu_custom_call.1} parent=1 // pred_check
      _
    $region3: #{tpu_custom_call.1} parent=1 // pred_check_branch
      %17 = sbr.rel (0) target = $region5
    $region4: #{tpu_custom_call.1} parent=1 // pred_region
      %s19 = ssub.s32 128, 128
      %20 = vsyncadd [#allocation3], %s19
      %s22 = sshll.u32 [#allocation2], 4
      %s23 = int_to_ptr.vmem [resolvable:$true] %s22
      %25 = dma.hbm_to_vmem [thread:$0]  %s0, 128, %s23, [#allocation3]
    $region5: #{tpu_custom_call.1} parent=1 // pred_fallthru
      _
    // Predicated region
    $region6: #{tpu_custom_call.1} parent=1 // pred_check
      _
    $region7: #{tpu_custom_call.1} parent=1 // pred_check_branch
      %27 = sbr.rel (0) target = $region9
    $region8: #{tpu_custom_call.1} parent=1 // pred_region
      %s29 = ssub.s32 128, 128
      %30 = vsyncadd [#allocation6], %s29
      %s32 = sshll.u32 [#allocation5], 4
      %s33 = int_to_ptr.vmem [resolvable:$true] %s32
      %35 = dma.hbm_to_vmem [thread:$0]  %s1, 128, %s33, [#allocation6]
    $region9: #{tpu_custom_call.1} parent=1 // pred_fallthru
      _
    // Predicated region
    $region10: #{tpu_custom_call.1} parent=1 // pred_check
      _
    $region11: #{tpu_custom_call.1} parent=1 // pred_check_branch
      %37 = sbr.rel (0) target = $region13
    $region12: #{tpu_custom_call.1} parent=1 // pred_region
      %s39 = ssub.s32 128, 128
      %40 = vsyncadd [#allocation6], %s39
      %s41 = sshll.u32 [#allocation7], 4
      %s42 = int_to_ptr.vmem [resolvable:$true] %s41
      %47 = dma.hbm_to_vmem [thread:$0]  %s2, 128, %s42, [#allocation6], 64, 64, 4
    $region13: #{tpu_custom_call.1} parent=1 // pred_fallthru
      _
    // Predicated region
    $region14: #{tpu_custom_call.1} parent=1 // pred_check
      _
    $region15: #{tpu_custom_call.1} parent=1 // pred_check_branch
      %49 = sbr.rel (0) target = $region17
    $region16: #{tpu_custom_call.1} parent=1 // pred_region
      %s51 = ssub.s32 1024, 1024
      %52 = vsyncadd [#allocation9], %s51
      %s53 = sshll.u32 [#allocation8], 4
      %s54 = int_to_ptr.vmem [resolvable:$true] %s53
      %59 = dma.hbm_to_vmem [thread:$0]  %s3, 1024, %s54, [#allocation9], 64, 64, 4
    $region17: #{tpu_custom_call.1} parent=1 // pred_fallthru
      _
    // Predicated region
    $region18: #{tpu_custom_call.1} parent=1 // pred_check
      _
    $region19: #{tpu_custom_call.1} parent=1 // pred_check_branch
      %61 = sbr.rel (0) target = $region21
    $region20: #{tpu_custom_call.1} parent=1 // pred_region
      _
    $region21: #{tpu_custom_call.1} parent=1 // pred_fallthru
      _
    // Predicated region
    $region22: #{tpu_custom_call.1} parent=1 // pred_check
      _
    $region23: #{tpu_custom_call.1} parent=1 // pred_check_branch
      %63 = sbr.rel (0) target = $region25
    $region24: #{tpu_custom_call.1} parent=1 // pred_region
      %s65 = ssub.s32 1024, 1024
      %66 = vsyncadd [#allocation9], %s65
      %s67 = sshll.u32 [#allocation10], 4
      %s68 = int_to_ptr.vmem [resolvable:$true] %s67
      %73 = dma.hbm_to_vmem [thread:$0]  %s5, 1024, %s68, [#allocation9], 64, 64, 4
    $region25: #{tpu_custom_call.1} parent=1 // pred_fallthru
      _
    // Predicated region
    $region26: #{tpu_custom_call.1} parent=1 // pred_check
      _
    $region27: #{tpu_custom_call.1} parent=1 // pred_check_branch
      %75 = sbr.rel (0) target = $region29
    $region28: #{tpu_custom_call.1} parent=1 // pred_region
      _
    $region29: #{tpu_custom_call.1} parent=1 // pred_fallthru
      _
    // Predicated region
    $region30: #{tpu_custom_call.1} parent=1 // pred_check
      _
    $region31: #{tpu_custom_call.1} parent=1 // pred_check_branch
      %77 = sbr.rel (0) target = $region33
    $region32: #{tpu_custom_call.1} parent=1 // pred_region
      %78 = dma.done [#allocation3], 128
    $region33: #{tpu_custom_call.1} parent=1 // pred_fallthru
      _
    // Predicated region
    $region34: #{tpu_custom_call.1} parent=1 // pred_check
      _
    $region35: #{tpu_custom_call.1} parent=1 // pred_check_branch
      %80 = sbr.rel (0) target = $region37
    $region36: #{tpu_custom_call.1} parent=1 // pred_region
      %81 = dma.done [#allocation6], 128
    $region37: #{tpu_custom_call.1} parent=1 // pred_fallthru
      _
    // Predicated region
    $region38: #{tpu_custom_call.1} parent=1 // pred_check
      _
    $region39: #{tpu_custom_call.1} parent=1 // pred_check_branch
      %83 = sbr.rel (0) target = $region41
    $region40: #{tpu_custom_call.1} parent=1 // pred_region
      %84 = dma.done [#allocation6], 128
    $region41: #{tpu_custom_call.1} parent=1 // pred_fallthru
      _
    // Predicated region
    $region42: #{tpu_custom_call.1} parent=1 // pred_check
      _
    $region43: #{tpu_custom_call.1} parent=1 // pred_check_branch
      %86 = sbr.rel (0) target = $region45
    $region44: #{tpu_custom_call.1} parent=1 // pred_region
      %87 = dma.done [#allocation9], 1024
    $region45: #{tpu_custom_call.1} parent=1 // pred_fallthru
      _
    // Predicated region
    $region46: #{tpu_custom_call.1} parent=1 // pred_check
      _
    $region47: #{tpu_custom_call.1} parent=1 // pred_check_branch
      %89 = sbr.rel (0) target = $region49
    $region48: #{tpu_custom_call.1} parent=1 // pred_region
      %90 = dma.done [#allocation9], 1024
    $region49: #{tpu_custom_call.1} parent=1 // pred_fallthru
      _
    %v92 = vld [vmem:[#allocation2] sm:$0xff]
    %v93 = vpack.c.bf16 %v92, %v92
    %v94 = vld [vmem:[#allocation5] sm:$0xff]
    %v95 = vpack.c.bf16 %v94, %v94
    %v96 = vld [vmem:[#allocation7] sm:$0xf]
    %v97 = vld [vmem:[#allocation7 + $0x4] sm:$0xf]
    %v98 = vld [vmem:[#allocation8] sm:$0xf]
    %v99 = vld [vmem:[#allocation8 + $0x4] sm:$0xf]
    %v100 = vld [vmem:[#allocation8 + $0x8] sm:$0xf]
    %v101 = vld [vmem:[#allocation8 + $0xc] sm:$0xf]
    %v102 = vld [vmem:[#allocation8 + $0x10] sm:$0xf]
    %v103 = vld [vmem:[#allocation8 + $0x14] sm:$0xf]
    %v104 = vld [vmem:[#allocation8 + $0x18] sm:$0xf]
    %v105 = vld [vmem:[#allocation8 + $0x1c] sm:$0xf]
    %v106 = vld [vmem:[#allocation8 + $0x20] sm:$0xf]
    %v107 = vld [vmem:[#allocation8 + $0x24] sm:$0xf]
    %v108 = vld [vmem:[#allocation8 + $0x28] sm:$0xf]
    %v109 = vld [vmem:[#allocation8 + $0x2c] sm:$0xf]
    %v110 = vld [vmem:[#allocation8 + $0x30] sm:$0xf]
    %v111 = vld [vmem:[#allocation8 + $0x34] sm:$0xf]
    %v112 = vld [vmem:[#allocation8 + $0x38] sm:$0xf]
    %v113 = vld [vmem:[#allocation8 + $0x3c] sm:$0xf]
    %v130 = vunpack.c.l.b16 %v98
    %v131 = vunpack.c.l.b16 %v99
    %v132 = vunpack.c.l.b16 %v100
    %v133 = vunpack.c.l.b16 %v101
    %v134 = vunpack.c.l.b16 %v102
    %v135 = vunpack.c.l.b16 %v103
    %v136 = vunpack.c.l.b16 %v104
    %v137 = vunpack.c.l.b16 %v105
    %v138 = vunpack.c.l.b16 %v106
    %v139 = vunpack.c.l.b16 %v107
    %v140 = vunpack.c.l.b16 %v108
    %v141 = vunpack.c.l.b16 %v109
    %v142 = vunpack.c.l.b16 %v110
    %v143 = vunpack.c.l.b16 %v111
    %v144 = vunpack.c.l.b16 %v112
    %v145 = vunpack.c.l.b16 %v113
    %v146 = vpack.c.b16 %v131, %v130
    %v147 = vpack.c.b16 %v133, %v132
    %v148 = vpack.c.b16 %v135, %v134
    %v149 = vpack.c.b16 %v137, %v136
    %v150 = vpack.c.b16 %v139, %v138
    %v151 = vpack.c.b16 %v141, %v140
    %v152 = vpack.c.b16 %v143, %v142
    %v153 = vpack.c.b16 %v145, %v144
    %162 = vmatprep.subr.bf16.mxu0 0
    %163 = vmatpush1.bf16.msra.mxu0 %v153
    %164 = vmatprep.subr.bf16.mxu0 0
    %165 = vmatpush1.bf16.msra.mxu0 %v152
    %166 = vmatprep.subr.bf16.mxu0 0
    %167 = vmatpush1.bf16.msra.mxu0 %v151
    %168 = vmatprep.subr.bf16.mxu0 0
    %169 = vmatpush1.bf16.msra.mxu0 %v150
    %170 = vmatprep.subr.bf16.mxu0 0
    %171 = vmatpush1.bf16.msra.mxu0 %v149
    %172 = vmatprep.subr.bf16.mxu0 0
    %173 = vmatpush1.bf16.msra.mxu0 %v148
    %174 = vmatprep.subr.bf16.mxu0 0
    %175 = vmatpush1.bf16.msra.mxu0 %v147
    %176 = vmatprep.subr.bf16.mxu0 0
    %177 = vmatpush1.bf16.msra.mxu0 %v146
    %178 = vmatprep.subr.bf16.mxu0 0
    %179 = vmatpush2.bf16.msra.mxu0 0
    %180 = vmatprep.subr.bf16.mxu0 0
    %181 = vmatpush2.bf16.msra.mxu0 0
    %182 = vmatprep.subr.bf16.mxu0 0
    %183 = vmatpush2.bf16.msra.mxu0 0
    %184 = vmatprep.subr.bf16.mxu0 0
    %185 = vmatpush2.bf16.msra.mxu0 0
    %186 = vmatprep.subr.bf16.mxu0 0
    %187 = vmatpush2.bf16.msra.mxu0 0
    %188 = vmatprep.subr.bf16.mxu0 0
    %189 = vmatpush2.bf16.msra.mxu0 0
    %190 = vmatprep.subr.bf16.mxu0 0
    %191 = vmatpush2.bf16.msra.mxu0 0
    %192 = vmatprep.subr.bf16.mxu0 0
    %193 = vmatpush2.bf16.msra.mxu0 0
    %194 = vmatprep.mubr.bf16.mxu0 0
    %195 = vmatmul.mubr.bf16.gmra.mxu0 %v95
    %v196 = vpop.f32.mrf.mxu0
    %v197 = vadd.f32 0.0, %v196
    %v198 = vpop.f32.mrf.mxu0
    %v199 = vpop.f32.mrf.mxu0
    %v200 = vpop.f32.mrf.mxu0
    %201 = vdwg.mxu0
    %v204 = vunpack.c.l.b16 %v96
    %v205 = vunpack.c.l.b16 %v97
    %v206 = vpack.c.b16 %v205, %v204
    %vm208 = vcmask 130048
    %v210 = vsel %vm208, %v93, 0
    %212 = vmatprep.subr.bf16.mxu0 0
    %213 = vmatpush1.bf16.msra.mxu0 0
    %214 = vmatprep.subr.bf16.mxu0 0
    %215 = vmatpush1.bf16.msra.mxu0 0
    %216 = vmatprep.subr.bf16.mxu0 0
    %217 = vmatpush1.bf16.msra.mxu0 0
    %218 = vmatprep.subr.bf16.mxu0 0
    %219 = vmatpush1.bf16.msra.mxu0 0
    %220 = vmatprep.subr.bf16.mxu0 0
    %221 = vmatpush1.bf16.msra.mxu0 0
    %222 = vmatprep.subr.bf16.mxu0 0
    %223 = vmatpush1.bf16.msra.mxu0 0
    %224 = vmatprep.subr.bf16.mxu0 0
    %225 = vmatpush1.bf16.msra.mxu0 0
    %226 = vmatprep.subr.bf16.mxu0 0
    %227 = vmatpush1.bf16.msra.mxu0 %v206
    %228 = vmatprep.subr.bf16.mxu0 0
    %229 = vmatpush2.bf16.msra.mxu0 0
    %230 = vmatprep.subr.bf16.mxu0 0
    %231 = vmatpush2.bf16.msra.mxu0 0
    %232 = vmatprep.subr.bf16.mxu0 0
    %233 = vmatpush2.bf16.msra.mxu0 0
    %234 = vmatprep.subr.bf16.mxu0 0
    %235 = vmatpush2.bf16.msra.mxu0 0
    %236 = vmatprep.subr.bf16.mxu0 0
    %237 = vmatpush2.bf16.msra.mxu0 0
    %238 = vmatprep.subr.bf16.mxu0 0
    %239 = vmatpush2.bf16.msra.mxu0 0
    %240 = vmatprep.subr.bf16.mxu0 0
    %241 = vmatpush2.bf16.msra.mxu0 0
    %242 = vmatprep.subr.bf16.mxu0 0
    %243 = vmatpush2.bf16.msra.mxu0 0
    %244 = vmatprep.mubr.bf16.mxu0 0
    %245 = vmatmul.mubr.bf16.gmra.mxu0 %v210
    %v246 = vpop.f32.mrf.mxu0
    %v247 = vadd.f32 %v197, %v246
    %v248 = vpop.f32.mrf.mxu0
    %v249 = vpop.f32.mrf.mxu0
    %v250 = vpop.f32.mrf.mxu0
    %251 = vdwg.mxu0
    %v252 = vld [vmem:[%s4] sm:$0x1]
    %v254 = vlaneseq
    %v255 = vshrl.u32 %v254, 7
    %v256 = vsub.s32 0, %v255
    %v257 = vrot.slane %v252, %v256
    %v259 = vadd.f32 %v247, %v257
    %v260 = vmax.f32 %v259, 0.0
    %v261 = vpack.c.bf16 %v260, %v260
    %v262 = vld [vmem:[#allocation10] sm:$0xf]
    %v263 = vld [vmem:[#allocation10 + $0x4] sm:$0xf]
    %v264 = vld [vmem:[#allocation10 + $0x8] sm:$0xf]
    %v265 = vld [vmem:[#allocation10 + $0xc] sm:$0xf]
    %v266 = vld [vmem:[#allocation10 + $0x10] sm:$0xf]
    %v267 = vld [vmem:[#allocation10 + $0x14] sm:$0xf]
    %v268 = vld [vmem:[#allocation10 + $0x18] sm:$0xf]
    %v269 = vld [vmem:[#allocation10 + $0x1c] sm:$0xf]
    %v270 = vld [vmem:[#allocation10 + $0x20] sm:$0xf]
    %v271 = vld [vmem:[#allocation10 + $0x24] sm:$0xf]
    %v272 = vld [vmem:[#allocation10 + $0x28] sm:$0xf]
    %v273 = vld [vmem:[#allocation10 + $0x2c] sm:$0xf]
    %v274 = vld [vmem:[#allocation10 + $0x30] sm:$0xf]
    %v275 = vld [vmem:[#allocation10 + $0x34] sm:$0xf]
    %v276 = vld [vmem:[#allocation10 + $0x38] sm:$0xf]
    %v277 = vld [vmem:[#allocation10 + $0x3c] sm:$0xf]
    %v294 = vunpack.c.l.b16 %v262
    %v295 = vunpack.c.l.b16 %v263
    %v296 = vunpack.c.l.b16 %v264
    %v297 = vunpack.c.l.b16 %v265
    %v298 = vunpack.c.l.b16 %v266
    %v299 = vunpack.c.l.b16 %v267
    %v300 = vunpack.c.l.b16 %v268
    %v301 = vunpack.c.l.b16 %v269
    %v302 = vunpack.c.l.b16 %v270
    %v303 = vunpack.c.l.b16 %v271
    %v304 = vunpack.c.l.b16 %v272
    %v305 = vunpack.c.l.b16 %v273
    %v306 = vunpack.c.l.b16 %v274
    %v307 = vunpack.c.l.b16 %v275
    %v308 = vunpack.c.l.b16 %v276
    %v309 = vunpack.c.l.b16 %v277
    %v310 = vpack.c.b16 %v295, %v294
    %v311 = vpack.c.b16 %v297, %v296
    %v312 = vpack.c.b16 %v299, %v298
    %v313 = vpack.c.b16 %v301, %v300
    %v314 = vpack.c.b16 %v303, %v302
    %v315 = vpack.c.b16 %v305, %v304
    %v316 = vpack.c.b16 %v307, %v306
    %v317 = vpack.c.b16 %v309, %v308
    %326 = vmatprep.subr.bf16.mxu0 0
    %327 = vmatpush1.bf16.msra.mxu0 %v317
    %328 = vmatprep.subr.bf16.mxu0 0
    %329 = vmatpush1.bf16.msra.mxu0 %v316
    %330 = vmatprep.subr.bf16.mxu0 0
    %331 = vmatpush1.bf16.msra.mxu0 %v315
    %332 = vmatprep.subr.bf16.mxu0 0
    %333 = vmatpush1.bf16.msra.mxu0 %v314
    %334 = vmatprep.subr.bf16.mxu0 0
    %335 = vmatpush1.bf16.msra.mxu0 %v313
    %336 = vmatprep.subr.bf16.mxu0 0
    %337 = vmatpush1.bf16.msra.mxu0 %v312
    %338 = vmatprep.subr.bf16.mxu0 0
    %339 = vmatpush1.bf16.msra.mxu0 %v311
    %340 = vmatprep.subr.bf16.mxu0 0
    %341 = vmatpush1.bf16.msra.mxu0 %v310
    %342 = vmatprep.subr.bf16.mxu0 0
    %343 = vmatpush2.bf16.msra.mxu0 0
    %344 = vmatprep.subr.bf16.mxu0 0
    %345 = vmatpush2.bf16.msra.mxu0 0
    %346 = vmatprep.subr.bf16.mxu0 0
    %347 = vmatpush2.bf16.msra.mxu0 0
    %348 = vmatprep.subr.bf16.mxu0 0
    %349 = vmatpush2.bf16.msra.mxu0 0
    %350 = vmatprep.subr.bf16.mxu0 0
    %351 = vmatpush2.bf16.msra.mxu0 0
    %352 = vmatprep.subr.bf16.mxu0 0
    %353 = vmatpush2.bf16.msra.mxu0 0
    %354 = vmatprep.subr.bf16.mxu0 0
    %355 = vmatpush2.bf16.msra.mxu0 0
    %356 = vmatprep.subr.bf16.mxu0 0
    %357 = vmatpush2.bf16.msra.mxu0 0
    %358 = vmatprep.mubr.bf16.mxu0 0
    %359 = vmatmul.mubr.bf16.gmra.mxu0 %v261
    %v360 = vpop.f32.mrf.mxu0
    %v361 = vadd.f32 0.0, %v360
    %v362 = vpop.f32.mrf.mxu0
    %v363 = vpop.f32.mrf.mxu0
    %v364 = vpop.f32.mrf.mxu0
    %365 = vdwg.mxu0
    %v366 = vld [vmem:[%s6] sm:$0x1]
    %v368 = vlaneseq
    %v369 = vshrl.u32 %v368, 7
    %v370 = vsub.s32 0, %v369
    %v371 = vrot.slane %v366, %v370
    %v373 = vadd.f32 %v361, %v371
    %vm374 = vcmask 48128
    %375 = vst.msk [vmem:[#allocation11] sm:$0xff] %vm374, %v373
    // Predicated region
    $region50: #{tpu_custom_call.1} parent=1 // pred_check
      _
    $region51: #{tpu_custom_call.1} parent=1 // pred_check_branch
      %377 = sbr.rel (0) target = $region53
    $region52: #{tpu_custom_call.1} parent=1 // pred_region
      %s379 = ssub.s32 128, 128
      %380 = vsyncadd [#allocation4], %s379
      %s382 = sshll.u32 [#allocation11], 4
      %s383 = int_to_ptr.vmem [resolvable:$true] %s382
      %385 = dma.vmem_to_hbm [thread:$0]  %s383, 128, %s7, [#allocation4]
    $region53: #{tpu_custom_call.1} parent=1 // pred_fallthru
      _
    // Predicated region
    $region54: #{tpu_custom_call.1} parent=1 // pred_check
      _
    $region55: #{tpu_custom_call.1} parent=1 // pred_check_branch
      %387 = sbr.rel (0) target = $region57
    $region56: #{tpu_custom_call.1} parent=1 // pred_region
      %388 = dma.done [#allocation4], 128
    $region57: #{tpu_custom_call.1} parent=1 // pred_fallthru
      _
    %389 = vsyncpa [#allocation3], 1
    %390 = vsyncpa [#allocation6], 1
    %391 = vsyncpa [#allocation9], 1
    %392 = vsyncpa [#allocation4], 1

</llo_original>
